<compile_context>
chip_gen: v5e
topology: v5e:2x2
jax: 0.10.0
libtpu: 0.0.40
codegen_flags: <defaults>
</compile_context>

<pallas_src>
import functools

import jax
import jax.numpy as jnp
from jax.experimental import pallas as pl
from jax.experimental.pallas import tpu as pltpu

LANE = 128     # MXU / vreg lane width
SUBLANE = 8    # f32 sublane granularity for the batch (second-to-minor) dim


def _round_up(x: int, m: int) -> int:
    return (x + m - 1) // m * m


def _critic_mlp_kernel(x_ref, w1_ref, b1_ref, w2_ref, b2_ref, w3_ref, b3_ref,
                       out_ref):
    # x arrives raw f32 (tile_b, D); cast to bf16 in VMEM (a few VPU pack ops)
    # -- removes the wrapper-side pad/cast HBM pass entirely.
    x = x_ref[...].astype(jnp.bfloat16)
    # Layer 1: (Tb, D) @ (D, H1p) on the MXU, bf16 inputs, f32 accumulate.
    # K = D may be short (e.g. 32); the kernel is HBM-bound so that's free.
    h1 = jnp.dot(x, w1_ref[...], preferred_element_type=jnp.float32)
    h1 = jnp.maximum(h1 + b1_ref[...], 0.0)
    # Layer 2: cast activation to bf16 for the MXU, keep f32 accumulation.
    h2 = jnp.dot(h1.astype(jnp.bfloat16), w2_ref[...],
                 preferred_element_type=jnp.float32)
    h2 = jnp.maximum(h2 + b2_ref[...], 0.0)
    # Value head (out_features == 1): VPU multiply + XLU cross-lane reduce
    # instead of a 1/128-lane MXU matmul.
    v = jnp.sum(h2 * w3_ref[...], axis=-1) + b3_ref[0, 0]        # (tile_b,)
    # Lane-dense store: output block is (1, tile_b), so the writeback is a
    # full-width row store instead of a 4-byte-wide strided column.
    out_ref[...] = v[None, :]


def _prepare_params(params):
    """Zero-pad the hidden feature dims to the 128-lane MXU granularity; cast
    matmul operands to bf16.  w1's contraction dim (obs_dim) stays unpadded;
    biases and the value-head row stay f32 (VPU path)."""
    w1, b1, w2, b2, w3, b3 = params
    D, H1 = w1.shape
    H2 = w2.shape[1]
    H1p, H2p = _round_up(H1, LANE), _round_up(H2, LANE)

    w1p = jnp.pad(w1, ((0, 0), (0, H1p - H1))).astype(jnp.bfloat16)
    b1p = jnp.pad(jnp.reshape(b1, (1, -1)),
                  ((0, 0), (0, H1p - H1))).astype(jnp.float32)
    w2p = jnp.pad(w2, ((0, H1p - H1), (0, H2p - H2))).astype(jnp.bfloat16)
    b2p = jnp.pad(jnp.reshape(b2, (1, -1)),
                  ((0, 0), (0, H2p - H2))).astype(jnp.float32)
    # Value-head weight as a lane-dense (1, H2p) row vector, f32.
    w3p = jnp.pad(jnp.reshape(w3, (1, -1)),
                  ((0, 0), (0, H2p - H2))).astype(jnp.float32)
    b3p = jnp.reshape(b3, (1, 1)).astype(jnp.float32)
    return (w1p, b1p, w2p, b2p, w3p, b3p), (D, H1p, H2p)


@functools.partial(jax.jit, static_argnames=("tile_b",))
def critic_forward(x, params, *, tile_b=4096):
    """x: (B, obs_dim) float32 stacked observations (one row per agent/obs).
    Returns the PPO critic's per-agent value estimates, shape (B,), float32."""
    (w1p, b1p, w2p, b2p, w3p, b3p), (D, H1p, H2p) = _prepare_params(params)
    x = x.astype(jnp.float32)
    B = x.shape[0]

    # Batch tile selection:
    #   * large default amortizes the ~0.35us per-grid-step overhead,
    #   * cap at ~B/2 so there are >=2 tiles whenever possible (v7x megacore),
    #   * round to the f32 sublane granularity; if one tile covers everything,
    #     use exactly B (block dim == full array dim is always legal).
    cap = _round_up(max(1, pl.cdiv(B, 2)), SUBLANE)
    tile_b = _round_up(max(SUBLANE, min(tile_b, cap)), SUBLANE)
    if tile_b >= B:
        tile_b = B
    num_tiles = pl.cdiv(B, tile_b)

    flops = 2 * B * (D * H1p + H1p * H2p + H2p)
    bytes_accessed = (x.size * 4 + w1p.size * 2 + w2p.size * 2
                      + (b1p.size + b2p.size + w3p.size + b3p.size) * 4
                      + num_tiles * tile_b * 4)

    out = pl.pallas_call(
        _critic_mlp_kernel,
        out_shape=jax.ShapeDtypeStruct((num_tiles, tile_b), jnp.float32),
        grid_spec=pltpu.PrefetchScalarGridSpec(
            num_scalar_prefetch=0,
            grid=(num_tiles,),
            in_specs=[
                # x: streamed raw f32 per batch tile (double-buffered DMA);
                # last dim = full obs_dim, so no feature padding is needed.
                pl.BlockSpec((tile_b, D), lambda i: (i, 0)),
                # Weights / biases: constant index_map -> VMEM-resident.
                pl.BlockSpec((D, H1p), lambda i: (0, 0)),
                pl.BlockSpec((1, H1p), lambda i: (0, 0)),
                pl.BlockSpec((H1p, H2p), lambda i: (0, 0)),
                pl.BlockSpec((1, H2p), lambda i: (0, 0)),
                pl.BlockSpec((1, H2p), lambda i: (0, 0)),
                # b3: scalar, lives in SMEM.
                pl.BlockSpec(memory_space=pltpu.MemorySpace.SMEM),
            ],
            # Lane-dense output: one (1, tile_b) row per grid step.
            out_specs=pl.BlockSpec((1, tile_b), lambda i: (i, 0)),
        ),
        compiler_params=pltpu.CompilerParams(
            dimension_semantics=("parallel",),   # shard batch across TCs (v7x)
            vmem_limit_bytes=32 * 1024 * 1024,
        ),
        cost_estimate=pl.CostEstimate(
            flops=flops, transcendentals=0, bytes_accessed=bytes_accessed),
    )(x, w1p, b1p, w2p, b2p, w3p, b3p)

    # Flatten (num_tiles, tile_b) row-major -> global batch order, drop tail.
    return out.reshape(-1)[:B]


def init_params(key, obs_dim, hidden1, hidden2):
    """Deterministic PyTorch-Linear-style init: U(-1/sqrt(fan_in), 1/sqrt(fan_in))."""
    def linear(k, fan_in, fan_out):
        kw, kb = jax.random.split(k)
        bound = 1.0 / jnp.sqrt(jnp.float32(fan_in))
        w = jax.random.uniform(kw, (fan_in, fan_out), jnp.float32, -bound, bound)
        b = jax.random.uniform(kb, (1, fan_out), jnp.float32, -bound, bound)
        return w, b

    k1, k2, k3 = jax.random.split(key, 3)
    w1, b1 = linear(k1, obs_dim, hidden1)
    w2, b2 = linear(k2, hidden1, hidden2)
    w3, b3 = linear(k3, hidden2, 1)
    return (w1, b1, w2, b2, w3, b3)


def _reference(x, params):
    """Reference with the same numerics as the kernel (bf16 matmul inputs,
    f32 accumulation, f32 multiply-reduce value head)."""
    w1, b1, w2, b2, w3, b3 = params
    h1 = jnp.dot(x.astype(jnp.bfloat16), w1.astype(jnp.bfloat16),
                 preferred_element_type=jnp.float32)
    h1 = jnp.maximum(h1 + b1, 0.0)
    h2 = jnp.dot(h1.astype(jnp.bfloat16), w2.astype(jnp.bfloat16),
                 preferred_element_type=jnp.float32)
    h2 = jnp.maximum(h2 + b2, 0.0)
    return jnp.sum(h2 * w3[:, 0][None, :], axis=-1) + b3[0, 0]


if __name__ == "__main__":
    key = jax.random.PRNGKey(0)
    k_obs, k_params = jax.random.split(key)

    # Small shapes consistent with an MLP critic over stacked per-agent obs.
    B, OBS_DIM, H1, H2 = 8, 32, 64, 64
    x = jax.random.normal(k_obs, (B, OBS_DIM), dtype=jnp.float32)
    params = init_params(k_params, OBS_DIM, H1, H2)

    values = jax.block_until_ready(critic_forward(x, params))
    ref = _reference(x, params)
    assert values.shape == (B,)
    assert values.dtype == jnp.float32
    assert jnp.allclose(values, ref, atol=1e-4, rtol=1e-3), \
        float(jnp.max(jnp.abs(values - ref)))

    # Second check: multi-tile grid + partial (masked) tail block path.
    B2 = 300
    x2 = jax.random.normal(jax.random.PRNGKey(7), (B2, OBS_DIM), jnp.float32)
    values2 = jax.block_until_ready(critic_forward(x2, params, tile_b=128))
    ref2 = _reference(x2, params)
    assert values2.shape == (B2,)
    assert jnp.allclose(values2, ref2, atol=1e-4, rtol=1e-3), \
        float(jnp.max(jnp.abs(values2 - ref2)))

    print("KERNEL_OK")
</pallas_src>

<mosaic_0001>
module attributes {stable_mosaic.version = 11 : i64} {
  func.func @_critic_mlp_kernel(%arg0: i32, %arg1: memref<8x32xf32, #tpu.memory_space<vmem>>, %arg2: memref<32x128xbf16, #tpu.memory_space<vmem>>, %arg3: memref<1x128xf32, #tpu.memory_space<vmem>>, %arg4: memref<128x128xbf16, #tpu.memory_space<vmem>>, %arg5: memref<1x128xf32, #tpu.memory_space<vmem>>, %arg6: memref<1x128xf32, #tpu.memory_space<vmem>>, %arg7: memref<1x1xf32, #tpu.memory_space<smem>>, %arg8: memref<1x8xf32, #tpu.memory_space<vmem>>) attributes {dimension_semantics = [#tpu.dimension_semantics<parallel>], iteration_bounds = array<i64: 1>, scalar_prefetch = 0 : i64, scratch_operands = 0 : i64, tpu.core_type = #tpu.core_type<tc>, window_params = [{transform_indices = @transform_0, window_bounds = array<i64: 8, 32>}, {pipeline_mode = #tpu.pipeline_mode<synchronous>, transform_indices = @transform_1, window_bounds = array<i64: 32, 128>}, {pipeline_mode = #tpu.pipeline_mode<synchronous>, transform_indices = @transform_2, window_bounds = array<i64: 1, 128>}, {pipeline_mode = #tpu.pipeline_mode<synchronous>, transform_indices = @transform_3, window_bounds = array<i64: 128, 128>}, {pipeline_mode = #tpu.pipeline_mode<synchronous>, transform_indices = @transform_4, window_bounds = array<i64: 1, 128>}, {pipeline_mode = #tpu.pipeline_mode<synchronous>, transform_indices = @transform_5, window_bounds = array<i64: 1, 128>}, {transform_indices = @transform_6, window_bounds = array<i64: 1, 1>}, {transform_indices = @transform_7, window_bounds = array<i64: 1, 8>}]} {
    %c0 = arith.constant 0 : index
    %c0_0 = arith.constant 0 : index
    %0 = vector.load %arg1[%c0, %c0_0] : memref<8x32xf32, #tpu.memory_space<vmem>>, vector<8x32xf32>
    %1 = arith.truncf %0 : vector<8x32xf32> to vector<8x32xbf16>
    %c0_1 = arith.constant 0 : index
    %c0_2 = arith.constant 0 : index
    %2 = vector.load %arg2[%c0_1, %c0_2] : memref<32x128xbf16, #tpu.memory_space<vmem>>, vector<32x128xbf16>
    %cst = arith.constant dense<0.000000e+00> : vector<8x128xf32>
    %3 = tpu.matmul %1, %2, %cst {dimension_numbers = #tpu.dot_dimension_numbers<[1], [0], [0], [1], [0, 0, 1, 1], [], []>} : vector<8x32xbf16>, vector<32x128xbf16>, vector<8x128xf32> -> vector<8x128xf32>
    %c0_3 = arith.constant 0 : index
    %c0_4 = arith.constant 0 : index
    %4 = vector.load %arg3[%c0_3, %c0_4] : memref<1x128xf32, #tpu.memory_space<vmem>>, vector<1x128xf32>
    %5 = vector.broadcast %4 : vector<1x128xf32> to vector<8x128xf32>
    %6 = arith.addf %3, %5 : vector<8x128xf32>
    %cst_5 = arith.constant 0.000000e+00 : f32
    %7 = vector.broadcast %cst_5 : f32 to vector<8x128xf32>
    %8 = arith.maximumf %6, %7 : vector<8x128xf32>
    %9 = arith.truncf %8 : vector<8x128xf32> to vector<8x128xbf16>
    %c0_6 = arith.constant 0 : index
    %c0_7 = arith.constant 0 : index
    %10 = vector.load %arg4[%c0_6, %c0_7] : memref<128x128xbf16, #tpu.memory_space<vmem>>, vector<128x128xbf16>
    %cst_8 = arith.constant dense<0.000000e+00> : vector<8x128xf32>
    %11 = tpu.matmul %9, %10, %cst_8 {dimension_numbers = #tpu.dot_dimension_numbers<[1], [0], [0], [1], [0, 0, 1, 1], [], []>} : vector<8x128xbf16>, vector<128x128xbf16>, vector<8x128xf32> -> vector<8x128xf32>
    %c0_9 = arith.constant 0 : index
    %c0_10 = arith.constant 0 : index
    %12 = vector.load %arg5[%c0_9, %c0_10] : memref<1x128xf32, #tpu.memory_space<vmem>>, vector<1x128xf32>
    %13 = vector.broadcast %12 : vector<1x128xf32> to vector<8x128xf32>
    %14 = arith.addf %11, %13 : vector<8x128xf32>
    %cst_11 = arith.constant 0.000000e+00 : f32
    %15 = vector.broadcast %cst_11 : f32 to vector<8x128xf32>
    %16 = arith.maximumf %14, %15 : vector<8x128xf32>
    %c0_12 = arith.constant 0 : index
    %c0_13 = arith.constant 0 : index
    %17 = vector.load %arg6[%c0_12, %c0_13] : memref<1x128xf32, #tpu.memory_space<vmem>>, vector<1x128xf32>
    %18 = vector.broadcast %17 : vector<1x128xf32> to vector<8x128xf32>
    %19 = arith.mulf %16, %18 : vector<8x128xf32>
    %cst_14 = arith.constant dense<0.000000e+00> : vector<8xf32>
    %20 = vector.multi_reduction <add>, %19, %cst_14 [1] : vector<8x128xf32> to vector<8xf32>
    %c0_15 = arith.constant 0 : index
    %c0_16 = arith.constant 0 : index
    %21 = memref.load %arg7[%c0_15, %c0_16] : memref<1x1xf32, #tpu.memory_space<smem>>
    %22 = vector.broadcast %21 : f32 to vector<8xf32>
    %23 = arith.addf %20, %22 : vector<8xf32>
    %24 = vector.shape_cast %23 : vector<8xf32> to vector<1x8xf32>
    %c0_17 = arith.constant 0 : index
    %c0_18 = arith.constant 0 : index
    %25 = vector.load %arg8[%c0_17, %c0_18] : memref<1x8xf32, #tpu.memory_space<vmem>>, vector<1x8xf32>
    tpu.vector_store %arg8[%c0_17, %c0_18], %24 {strides = array<i32>} : memref<1x8xf32, #tpu.memory_space<vmem>>, vector<1x8xf32>,
    return
  }
  func.func @transform_0(%arg0: i32) -> (i32, i32) {
    %c0_i32 = arith.constant 0 : i32
    %c0_i32_0 = arith.constant 0 : i32
    return %arg0, %c0_i32 : i32, i32
  }
  func.func @transform_1(%arg0: i32) -> (i32, i32) {
    %c0_i32 = arith.constant 0 : i32
    %c0_i32_0 = arith.constant 0 : i32
    %c0_i32_1 = arith.constant 0 : i32
    return %c0_i32, %c0_i32_0 : i32, i32
  }
  func.func @transform_2(%arg0: i32) -> (i32, i32) {
    %c0_i32 = arith.constant 0 : i32
    %c0_i32_0 = arith.constant 0 : i32
    %c0_i32_1 = arith.constant 0 : i32
    return %c0_i32, %c0_i32_0 : i32, i32
  }
  func.func @transform_3(%arg0: i32) -> (i32, i32) {
    %c0_i32 = arith.constant 0 : i32
    %c0_i32_0 = arith.constant 0 : i32
    %c0_i32_1 = arith.constant 0 : i32
    return %c0_i32, %c0_i32_0 : i32, i32
  }
  func.func @transform_4(%arg0: i32) -> (i32, i32) {
    %c0_i32 = arith.constant 0 : i32
    %c0_i32_0 = arith.constant 0 : i32
    %c0_i32_1 = arith.constant 0 : i32
    return %c0_i32, %c0_i32_0 : i32, i32
  }
  func.func @transform_5(%arg0: i32) -> (i32, i32) {
    %c0_i32 = arith.constant 0 : i32
    %c0_i32_0 = arith.constant 0 : i32
    %c0_i32_1 = arith.constant 0 : i32
    return %c0_i32, %c0_i32_0 : i32, i32
  }
  func.func @transform_6(%arg0: i32) -> (i32, i32) {
    %c0_i32 = arith.constant 0 : i32
    %c0_i32_0 = arith.constant 0 : i32
    %c0_i32_1 = arith.constant 0 : i32
    return %c0_i32, %c0_i32_0 : i32, i32
  }
  func.func @transform_7(%arg0: i32) -> (i32, i32) {
    %c0_i32 = arith.constant 0 : i32
    %c0_i32_0 = arith.constant 0 : i32
    return %arg0, %c0_i32 : i32, i32
  }
}

</mosaic_0001>

<llo_original>
// kernel: critic_forward.1
$region0: #{critic_forward.1}
  #allocation0 [shape = 'u32[]', space=smem, size = 0x4, offset = 0x4, fixed_abs, tag = 'smem constant byte address 0x4 - core index']
  #allocation1 [shape = 'u32[72,128]{1,0:T(1,128)}', space=vmem, size = 0x9000, scoped, tag = 'internal scratch']
  #allocation2 [shape = 'f32[1,1]{1,0:T(1,128)S(6)}', space=smem, size = 0x200, scoped, tag = 'scoped memory for critic_forward.1']
  %s0 = inlined_call_operand.vmem [shape: f32[8,32], index: 0, kind: input, shape index: {}]
  %s1 = inlined_call_operand.vmem [shape: bf16[32,128], index: 1, kind: input, shape index: {}]
  %s2 = inlined_call_operand.vmem [shape: f32[1,128], index: 2, kind: input, shape index: {}]
  %s3 = inlined_call_operand.vmem [shape: bf16[128,128], index: 3, kind: input, shape index: {}]
  %s4 = inlined_call_operand.vmem [shape: f32[1,128], index: 4, kind: input, shape index: {}]
  %s5 = inlined_call_operand.vmem [shape: f32[1,128], index: 5, kind: input, shape index: {}]
  %s6 = inlined_call_operand.<no memory space> [shape: f32[1,1], index: 6, kind: input, shape index: {}]
  %s7 = inlined_call_operand.hbm [shape: f32[1,8], index: 7, kind: output, shape index: {}]
  %s8 = sld [smem:[#allocation0]]
  $region38: #{critic_forward.1} parent=0
    _
  %s10 = ssub.s32 1, %s8
  %s11 = scalar_select 0, %s10, %s8
  %12 = sst [smem:[#allocation2]] %s6
  $region1: #{critic_forward.1} parent=0
    #allocation3 [shape = 'u8[512]{0}', space=vmem, size = 0x400, scoped, tag = 'output window, operand 0, single buffered']
    #allocation4 [shape = 's32[1]{0}', space=sflag, size = 0x4, scoped, tag = 'scoped memory for critic_forward.1']
    %13 = vsyncpa [#allocation4], 0
    // Predicated region
    $region2: #{critic_forward.1} parent=1 // pred_check
      _
    $region3: #{critic_forward.1} parent=1 // pred_check_branch
      %15 = sbr.rel (0) target = $region5
    $region4: #{critic_forward.1} parent=1 // pred_region
      _
    $region5: #{critic_forward.1} parent=1 // pred_fallthru
      _
    // Predicated region
    $region6: #{critic_forward.1} parent=1 // pred_check
      _
    $region7: #{critic_forward.1} parent=1 // pred_check_branch
      %17 = sbr.rel (0) target = $region9
    $region8: #{critic_forward.1} parent=1 // pred_region
      _
    $region9: #{critic_forward.1} parent=1 // pred_fallthru
      _
    // Predicated region
    $region10: #{critic_forward.1} parent=1 // pred_check
      _
    $region11: #{critic_forward.1} parent=1 // pred_check_branch
      %19 = sbr.rel (0) target = $region13
    $region12: #{critic_forward.1} parent=1 // pred_region
      _
    $region13: #{critic_forward.1} parent=1 // pred_fallthru
      _
    // Predicated region
    $region14: #{critic_forward.1} parent=1 // pred_check
      _
    $region15: #{critic_forward.1} parent=1 // pred_check_branch
      %21 = sbr.rel (0) target = $region17
    $region16: #{critic_forward.1} parent=1 // pred_region
      _
    $region17: #{critic_forward.1} parent=1 // pred_fallthru
      _
    // Predicated region
    $region18: #{critic_forward.1} parent=1 // pred_check
      _
    $region19: #{critic_forward.1} parent=1 // pred_check_branch
      %23 = sbr.rel (0) target = $region21
    $region20: #{critic_forward.1} parent=1 // pred_region
      _
    $region21: #{critic_forward.1} parent=1 // pred_fallthru
      _
    // Predicated region
    $region22: #{critic_forward.1} parent=1 // pred_check
      _
    $region23: #{critic_forward.1} parent=1 // pred_check_branch
      %25 = sbr.rel (0) target = $region25
    $region24: #{critic_forward.1} parent=1 // pred_region
      _
    $region25: #{critic_forward.1} parent=1 // pred_fallthru
      _
    // Predicated region
    $region26: #{critic_forward.1} parent=1 // pred_check
      _
    $region27: #{critic_forward.1} parent=1 // pred_check_branch
      %27 = sbr.rel (0) target = $region29
    $region28: #{critic_forward.1} parent=1 // pred_region
      _
    $region29: #{critic_forward.1} parent=1 // pred_fallthru
      _
    %v29 = vld [vmem:[%s0] sm:$0xff]
    %v30 = vpack.c.bf16 %v29, %v29
    %v31 = vld [vmem:[%s1] sm:$0xf]
    %v32 = vld [vmem:[%s1 + $0x4] sm:$0xf]
    %v33 = vld [vmem:[%s1 + $0x8] sm:$0xf]
    %v34 = vld [vmem:[%s1 + $0xc] sm:$0xf]
    %v35 = vld [vmem:[%s2] sm:$0x1]
    %v37 = vperm.slane %v35, 0
    %v43 = vunpack.c.l.b16 %v31
    %v44 = vunpack.c.l.b16 %v32
    %v45 = vunpack.c.l.b16 %v33
    %v46 = vunpack.c.l.b16 %v34
    %v47 = vpack.c.b16 %v44, %v43
    %v48 = vpack.c.b16 %v46, %v45
    %vm51 = vcmask 261120
    %v53 = vsel %vm51, %v30, 0
    %55 = vmatpush.bf16.msra.mxu0 0
    %56 = vmatpush.bf16.msra.mxu0 0
    %57 = vmatpush.bf16.msra.mxu0 0
    %58 = vmatpush.bf16.msra.mxu0 0
    %59 = vmatpush.bf16.msra.mxu0 0
    %60 = vmatpush.bf16.msra.mxu0 0
    %61 = vmatpush.bf16.msra.mxu0 %v48
    %62 = vmatpush.bf16.msra.mxu0 %v47
    %63 = vmatmul.bf16.gmra.mxu0 %v53
    %v64 = vpop.f32.mrf.mxu0
    %v65 = vadd.f32 %v37, %v64
    %v66 = vpop.f32.mrf.mxu0
    %67 = vdwg.mxu0
    %v68 = vmax.f32 %v65, 0.0
    %v69 = vpack.c.bf16 %v68, %v68
    %v70 = vld [vmem:[%s3] sm:$0xf]
    %v71 = vld [vmem:[%s3 + $0x4] sm:$0xf]
    %v72 = vld [vmem:[%s3 + $0x8] sm:$0xf]
    %v73 = vld [vmem:[%s3 + $0xc] sm:$0xf]
    %v74 = vld [vmem:[%s3 + $0x10] sm:$0xf]
    %v75 = vld [vmem:[%s3 + $0x14] sm:$0xf]
    %v76 = vld [vmem:[%s3 + $0x18] sm:$0xf]
    %v77 = vld [vmem:[%s3 + $0x1c] sm:$0xf]
    %v78 = vld [vmem:[%s3 + $0x20] sm:$0xf]
    %v79 = vld [vmem:[%s3 + $0x24] sm:$0xf]
    %v80 = vld [vmem:[%s3 + $0x28] sm:$0xf]
    %v81 = vld [vmem:[%s3 + $0x2c] sm:$0xf]
    %v82 = vld [vmem:[%s3 + $0x30] sm:$0xf]
    %v83 = vld [vmem:[%s3 + $0x34] sm:$0xf]
    %v84 = vld [vmem:[%s3 + $0x38] sm:$0xf]
    %v85 = vld [vmem:[%s3 + $0x3c] sm:$0xf]
    %v86 = vld [vmem:[%s4] sm:$0x1]
    %v88 = vperm.slane %v86, 0
    %v106 = vunpack.c.l.b16 %v70
    %v107 = vunpack.c.l.b16 %v71
    %v108 = vunpack.c.l.b16 %v72
    %v109 = vunpack.c.l.b16 %v73
    %v110 = vunpack.c.l.b16 %v74
    %v111 = vunpack.c.l.b16 %v75
    %v112 = vunpack.c.l.b16 %v76
    %v113 = vunpack.c.l.b16 %v77
    %v114 = vunpack.c.l.b16 %v78
    %v115 = vunpack.c.l.b16 %v79
    %v116 = vunpack.c.l.b16 %v80
    %v117 = vunpack.c.l.b16 %v81
    %v118 = vunpack.c.l.b16 %v82
    %v119 = vunpack.c.l.b16 %v83
    %v120 = vunpack.c.l.b16 %v84
    %v121 = vunpack.c.l.b16 %v85
    %v122 = vpack.c.b16 %v107, %v106
    %v123 = vpack.c.b16 %v109, %v108
    %v124 = vpack.c.b16 %v111, %v110
    %v125 = vpack.c.b16 %v113, %v112
    %v126 = vpack.c.b16 %v115, %v114
    %v127 = vpack.c.b16 %v117, %v116
    %v128 = vpack.c.b16 %v119, %v118
    %v129 = vpack.c.b16 %v121, %v120
    %138 = vmatpush.bf16.msra.mxu0 %v129
    %139 = vmatpush.bf16.msra.mxu0 %v128
    %140 = vmatpush.bf16.msra.mxu0 %v127
    %141 = vmatpush.bf16.msra.mxu0 %v126
    %142 = vmatpush.bf16.msra.mxu0 %v125
    %143 = vmatpush.bf16.msra.mxu0 %v124
    %144 = vmatpush.bf16.msra.mxu0 %v123
    %145 = vmatpush.bf16.msra.mxu0 %v122
    %146 = vmatmul.bf16.gmra.mxu0 %v69
    %v147 = vpop.f32.mrf.mxu0
    %v148 = vadd.f32 %v88, %v147
    %v149 = vpop.f32.mrf.mxu0
    %150 = vdwg.mxu0
    %v151 = vmax.f32 %v148, 0.0
    %v152 = vld [vmem:[%s5] sm:$0x1]
    %v154 = vperm.slane %v152, 0
    %v156 = vmul.f32 %v151, %v154
    %157 = vadd.xlane.f32.xlu0 %v156
    %v158 = vpop.xlane.xlu0 %157
    %s159 = sld [smem:[#allocation2]]
    %v160 = vstv %s159
    %v161 = vadd.f32 %v158, %v160
    %v163 = vlaneseq
    %v164 = vand.u32 %v163, 127
    %v165 = vperm.slane %v161, %v164
    %vm167 = vcmask 57344
    %168 = vst.msk [vmem:[#allocation3] sm:$0x1] %vm167, %v165
    // Predicated region
    $region30: #{critic_forward.1} parent=1 // pred_check
      _
    $region31: #{critic_forward.1} parent=1 // pred_check_branch
      %170 = sbr.rel (0) target = $region33
    $region32: #{critic_forward.1} parent=1 // pred_region
      %172 = vsyncadd [#allocation4], 0
      %s174 = sshll.u32 [#allocation3], 4
      %s175 = int_to_ptr.vmem [resolvable:$true] %s174
      %s176 = sshll.u32 %s7, 4
      %s177 = int_to_ptr.hbm [resolvable:$true] %s176
      %179 = dma.vmem_to_hbm [thread:$0]  %s175, 16, %s177, [#allocation4]
    $region33: #{critic_forward.1} parent=1 // pred_fallthru
      _
    // Predicated region
    $region34: #{critic_forward.1} parent=1 // pred_check
      _
    $region35: #{critic_forward.1} parent=1 // pred_check_branch
      %181 = sbr.rel (0) target = $region37
    $region36: #{critic_forward.1} parent=1 // pred_region
      %183 = dma.done [#allocation4], 16
    $region37: #{critic_forward.1} parent=1 // pred_fallthru
      _
    %184 = vsyncpa [#allocation4], 1

</llo_original>
